<compile_context>
chip_gen: v6e
topology: v6e:2x2x1
jax: 0.10.0
libtpu: 0.0.40
codegen_flags: <defaults>
</compile_context>

<pallas_src>
import jax
import jax.numpy as jnp
from jax import lax
from jax.experimental import pallas as pl
from jax.experimental.pallas import tpu as pltpu

# ---------------- configuration (small, deterministic) ----------------
IN_DIM = 32                       # in_dim == out_dim for AnfisLayer
N_RULES = 8
BATCH = 64                        # small demo batch; folds to 16 lane-dense rows
NORMAL_DIS_FACTOR = 2.0
LANE_FOLD = 128 // IN_DIM         # batch rows folded onto the 128-lane axis
LANES = LANE_FOLD * IN_DIM        # = 128
CHUNK = 8                         # one f32 vreg worth of sublanes
LOG2E = 1.4426950408889634


def anfis_kernel(x_ref, prm_ref, o_ref):
    """One batch tile of the ANFIS forward pass (lane-folded layout).

    x_ref:   (TB, 128)          folded activations (LANE_FOLD batch rows per row)
    prm_ref: (4*N_RULES, 128)   stacked [centers; g2=-0.5*log2(e)/w^2; params; biases],
                                each rule row lane-tiled to width 128
    o_ref:   (TB, 128)          folded output
    """
    tb = x_ref.shape[0]
    n_chunks = tb // CHUNK

    # Hoist per-rule parameter rows out of the chunk loop: one (1,128) vreg each,
    # 32 loads per grid step total, reused for every 8-row chunk via broadcasting.
    c_rows = [prm_ref[pl.ds(0 * N_RULES + r, 1), :] for r in range(N_RULES)]
    g_rows = [prm_ref[pl.ds(1 * N_RULES + r, 1), :] for r in range(N_RULES)]
    p_rows = [prm_ref[pl.ds(2 * N_RULES + r, 1), :] for r in range(N_RULES)]
    b_rows = [prm_ref[pl.ds(3 * N_RULES + r, 1), :] for r in range(N_RULES)]

    def chunk_body(ci, carry):
        row = pl.multiple_of(ci * CHUNK, CHUNK)
        x = x_ref[pl.ds(row, CHUNK), :]                    # (CHUNK, 128)
        acc = jnp.zeros_like(x)                            # sum_r m_r * defuzz_r
        msum = jnp.zeros_like(x)                           # sum_r m_r
        for r in range(N_RULES):                           # static unroll; pure VPU/EUP
            d = x - c_rows[r]
            m = jnp.exp2(d * d * g_rows[r])                # gaussian membership (exp folded)
            msum = msum + m
            acc = acc + m * (x * p_rows[r] + b_rows[r])    # order-1 consequent
        # normalize_rules=True; exact divide for robustness (review note).
        o_ref[pl.ds(row, CHUNK), :] = acc / msum
        return carry

    # fori_loop (not a Python for) bounds the per-chunk vreg live ranges.
    lax.fori_loop(0, n_chunks, chunk_body, 0,
                  unroll=n_chunks if n_chunks <= 4 else 4)


def _pick_batch_tile(rows):
    """rows = folded batch rows (B // LANE_FOLD).

    Small workloads: ONE grid step.  At rows<=256 the whole tile is only a few
    microseconds of VPU/EUP work, so each extra grid step is ~0.35us of pure
    overhead (and on v7x each TC would get ~0.05us of work behind it).

    Large batch: 256-row tiles (128 KiB in + 128 KiB out per step) amortize the
    step overhead while giving >=4 parallel steps so the v7x megacore split and
    the BlockSpec pipeline both have slack.  vreg pressure is bounded by the
    in-kernel 8-row chunk loop, not tb; VMEM is nowhere near a constraint.
    """
    if rows <= 256:
        return rows
    tb = 256
    while rows % tb:
        tb //= 2
    return max(tb, CHUNK)


def prepare_anfis_params(centers, widths, params, biases, dtype=jnp.float32):
    """One-time (per parameter update) prep: rule-major layout, lane-tiled to 128,
    exp2 gain folded in, all four stacked into a single (4*N_RULES, 128) slab so
    the kernel needs one buffered input for all parameters."""
    g2 = (-0.5 * LOG2E) / (widths * widths)     # exp(-d^2/(2w^2)) == exp2(d^2 * g2)

    def prep(a):
        return jnp.tile(a.T, (1, LANE_FOLD))    # (N_RULES, 128)

    return jnp.concatenate(
        [prep(centers), prep(g2), prep(params), prep(biases)], axis=0
    ).astype(dtype)                              # (4*N_RULES, 128)


def anfis_forward(x, prm, *, tb=None):
    """x: (B, in_dim); prm: output of prepare_anfis_params (hoisted off the hot path)."""
    B, D = x.shape
    assert D == IN_DIM
    assert 128 % D == 0
    assert B % (LANE_FOLD * CHUNK) == 0          # lane folding + 8-row chunking

    rows = B // LANE_FOLD
    if tb is None:
        tb = _pick_batch_tile(rows)
    assert rows % tb == 0 and tb % CHUNK == 0

    # Lane-dense folded view of the activations (contiguous row-major reshape).
    x_f = x.reshape(rows, LANES)

    grid = (rows // tb,)
    out_f = pl.pallas_call(
        anfis_kernel,
        out_shape=jax.ShapeDtypeStruct((rows, LANES), x.dtype),
        grid_spec=pltpu.PrefetchScalarGridSpec(
            num_scalar_prefetch=0,
            grid=grid,
            in_specs=[
                pl.BlockSpec((tb, LANES), lambda i: (i, 0)),            # x (folded)
                # constant block index; double-buffering it costs only ~16 KiB,
                # so no need to tweak pipeline depth here.
                pl.BlockSpec((4 * N_RULES, LANES), lambda i: (0, 0)),   # stacked params
            ],
            out_specs=pl.BlockSpec((tb, LANES), lambda i: (i, 0)),
        ),
        compiler_params=pltpu.CompilerParams(
            dimension_semantics=("parallel",),
        ),
    )(x_f, prm)

    return out_f.reshape(B, D)


def anfis_reference(x, centers, widths, params, biases):
    """Pure-JAX reference mirroring the PyTorch forward exactly."""
    xe = x[:, :, None]                                        # (B, D, R)
    m = jnp.exp(-(xe - centers) ** 2 / (2.0 * widths ** 2))
    re = m / jnp.sum(m, axis=-1, keepdims=True)
    dz = xe * params + biases
    return jnp.sum(re * dz, axis=-1)


# TODO(synk): only the Gaussian / order=1 / normalize_rules=True configuration is
# implemented; Triangular, Difference-of-Sigmoid, Multifunction and order=0 paths
# would need separate (but analogous) kernels.

if __name__ == "__main__":
    key = jax.random.PRNGKey(0)
    k_x, k_c, k_w, k_p, k_b = jax.random.split(key, 5)

    # Deterministic parameter init matching the module's shapes; widths are kept
    # away from 0 so memberships never fully underflow (the torch init allows
    # widths ~ 0, which NaNs the reference too).
    centers = jax.random.normal(k_c, (IN_DIM, N_RULES), jnp.float32) * NORMAL_DIS_FACTOR
    widths = (0.25 + 0.75 * jax.random.uniform(k_w, (IN_DIM, N_RULES), jnp.float32)) * NORMAL_DIS_FACTOR
    params = jax.random.normal(k_p, (IN_DIM, N_RULES), jnp.float32) * NORMAL_DIS_FACTOR
    biases = jax.random.normal(k_b, (IN_DIM, N_RULES), jnp.float32) * NORMAL_DIS_FACTOR

    x = jax.random.normal(k_x, (BATCH, IN_DIM), jnp.float32)

    # Parameter prep runs once per parameter update, off the per-call hot path.
    prm = prepare_anfis_params(centers, widths, params, biases)

    out = jax.block_until_ready(anfis_forward(x, prm))

    ref = anfis_reference(x, centers, widths, params, biases)
    assert out.shape == (BATCH, IN_DIM)
    assert jnp.allclose(out, ref, rtol=2e-5, atol=1e-5), "mismatch vs reference"

    print("KERNEL_OK")
</pallas_src>

<mosaic_0001>
module attributes {stable_mosaic.version = 11 : i64} {
  func.func @anfis_kernel(%arg0: i32, %arg1: memref<16x128xf32, #tpu.memory_space<vmem>>, %arg2: memref<32x128xf32, #tpu.memory_space<vmem>>, %arg3: memref<16x128xf32, #tpu.memory_space<vmem>>) attributes {dimension_semantics = [#tpu.dimension_semantics<parallel>], iteration_bounds = array<i64: 1>, scalar_prefetch = 0 : i64, scratch_operands = 0 : i64, tpu.core_type = #tpu.core_type<tc>, window_params = [{transform_indices = @transform_0, window_bounds = array<i64: 16, 128>}, {pipeline_mode = #tpu.pipeline_mode<synchronous>, transform_indices = @transform_1, window_bounds = array<i64: 32, 128>}, {transform_indices = @transform_2, window_bounds = array<i64: 16, 128>}]} {
    %c0 = arith.constant 0 : index
    %c0_0 = arith.constant 0 : index
    %0 = vector.load %arg2[%c0, %c0_0] : memref<32x128xf32, #tpu.memory_space<vmem>>, vector<1x128xf32>
    %c1 = arith.constant 1 : index
    %c0_1 = arith.constant 0 : index
    %1 = vector.load %arg2[%c1, %c0_1] : memref<32x128xf32, #tpu.memory_space<vmem>>, vector<1x128xf32>
    %c2 = arith.constant 2 : index
    %c0_2 = arith.constant 0 : index
    %2 = vector.load %arg2[%c2, %c0_2] : memref<32x128xf32, #tpu.memory_space<vmem>>, vector<1x128xf32>
    %c3 = arith.constant 3 : index
    %c0_3 = arith.constant 0 : index
    %3 = vector.load %arg2[%c3, %c0_3] : memref<32x128xf32, #tpu.memory_space<vmem>>, vector<1x128xf32>
    %c4 = arith.constant 4 : index
    %c0_4 = arith.constant 0 : index
    %4 = vector.load %arg2[%c4, %c0_4] : memref<32x128xf32, #tpu.memory_space<vmem>>, vector<1x128xf32>
    %c5 = arith.constant 5 : index
    %c0_5 = arith.constant 0 : index
    %5 = vector.load %arg2[%c5, %c0_5] : memref<32x128xf32, #tpu.memory_space<vmem>>, vector<1x128xf32>
    %c6 = arith.constant 6 : index
    %c0_6 = arith.constant 0 : index
    %6 = vector.load %arg2[%c6, %c0_6] : memref<32x128xf32, #tpu.memory_space<vmem>>, vector<1x128xf32>
    %c7 = arith.constant 7 : index
    %c0_7 = arith.constant 0 : index
    %7 = vector.load %arg2[%c7, %c0_7] : memref<32x128xf32, #tpu.memory_space<vmem>>, vector<1x128xf32>
    %c8 = arith.constant 8 : index
    %c0_8 = arith.constant 0 : index
    %8 = vector.load %arg2[%c8, %c0_8] : memref<32x128xf32, #tpu.memory_space<vmem>>, vector<1x128xf32>
    %c9 = arith.constant 9 : index
    %c0_9 = arith.constant 0 : index
    %9 = vector.load %arg2[%c9, %c0_9] : memref<32x128xf32, #tpu.memory_space<vmem>>, vector<1x128xf32>
    %c10 = arith.constant 10 : index
    %c0_10 = arith.constant 0 : index
    %10 = vector.load %arg2[%c10, %c0_10] : memref<32x128xf32, #tpu.memory_space<vmem>>, vector<1x128xf32>
    %c11 = arith.constant 11 : index
    %c0_11 = arith.constant 0 : index
    %11 = vector.load %arg2[%c11, %c0_11] : memref<32x128xf32, #tpu.memory_space<vmem>>, vector<1x128xf32>
    %c12 = arith.constant 12 : index
    %c0_12 = arith.constant 0 : index
    %12 = vector.load %arg2[%c12, %c0_12] : memref<32x128xf32, #tpu.memory_space<vmem>>, vector<1x128xf32>
    %c13 = arith.constant 13 : index
    %c0_13 = arith.constant 0 : index
    %13 = vector.load %arg2[%c13, %c0_13] : memref<32x128xf32, #tpu.memory_space<vmem>>, vector<1x128xf32>
    %c14 = arith.constant 14 : index
    %c0_14 = arith.constant 0 : index
    %14 = vector.load %arg2[%c14, %c0_14] : memref<32x128xf32, #tpu.memory_space<vmem>>, vector<1x128xf32>
    %c15 = arith.constant 15 : index
    %c0_15 = arith.constant 0 : index
    %15 = vector.load %arg2[%c15, %c0_15] : memref<32x128xf32, #tpu.memory_space<vmem>>, vector<1x128xf32>
    %c16 = arith.constant 16 : index
    %c0_16 = arith.constant 0 : index
    %16 = vector.load %arg2[%c16, %c0_16] : memref<32x128xf32, #tpu.memory_space<vmem>>, vector<1x128xf32>
    %c17 = arith.constant 17 : index
    %c0_17 = arith.constant 0 : index
    %17 = vector.load %arg2[%c17, %c0_17] : memref<32x128xf32, #tpu.memory_space<vmem>>, vector<1x128xf32>
    %c18 = arith.constant 18 : index
    %c0_18 = arith.constant 0 : index
    %18 = vector.load %arg2[%c18, %c0_18] : memref<32x128xf32, #tpu.memory_space<vmem>>, vector<1x128xf32>
    %c19 = arith.constant 19 : index
    %c0_19 = arith.constant 0 : index
    %19 = vector.load %arg2[%c19, %c0_19] : memref<32x128xf32, #tpu.memory_space<vmem>>, vector<1x128xf32>
    %c20 = arith.constant 20 : index
    %c0_20 = arith.constant 0 : index
    %20 = vector.load %arg2[%c20, %c0_20] : memref<32x128xf32, #tpu.memory_space<vmem>>, vector<1x128xf32>
    %c21 = arith.constant 21 : index
    %c0_21 = arith.constant 0 : index
    %21 = vector.load %arg2[%c21, %c0_21] : memref<32x128xf32, #tpu.memory_space<vmem>>, vector<1x128xf32>
    %c22 = arith.constant 22 : index
    %c0_22 = arith.constant 0 : index
    %22 = vector.load %arg2[%c22, %c0_22] : memref<32x128xf32, #tpu.memory_space<vmem>>, vector<1x128xf32>
    %c23 = arith.constant 23 : index
    %c0_23 = arith.constant 0 : index
    %23 = vector.load %arg2[%c23, %c0_23] : memref<32x128xf32, #tpu.memory_space<vmem>>, vector<1x128xf32>
    %c24 = arith.constant 24 : index
    %c0_24 = arith.constant 0 : index
    %24 = vector.load %arg2[%c24, %c0_24] : memref<32x128xf32, #tpu.memory_space<vmem>>, vector<1x128xf32>
    %c25 = arith.constant 25 : index
    %c0_25 = arith.constant 0 : index
    %25 = vector.load %arg2[%c25, %c0_25] : memref<32x128xf32, #tpu.memory_space<vmem>>, vector<1x128xf32>
    %c26 = arith.constant 26 : index
    %c0_26 = arith.constant 0 : index
    %26 = vector.load %arg2[%c26, %c0_26] : memref<32x128xf32, #tpu.memory_space<vmem>>, vector<1x128xf32>
    %c27 = arith.constant 27 : index
    %c0_27 = arith.constant 0 : index
    %27 = vector.load %arg2[%c27, %c0_27] : memref<32x128xf32, #tpu.memory_space<vmem>>, vector<1x128xf32>
    %c28 = arith.constant 28 : index
    %c0_28 = arith.constant 0 : index
    %28 = vector.load %arg2[%c28, %c0_28] : memref<32x128xf32, #tpu.memory_space<vmem>>, vector<1x128xf32>
    %c29 = arith.constant 29 : index
    %c0_29 = arith.constant 0 : index
    %29 = vector.load %arg2[%c29, %c0_29] : memref<32x128xf32, #tpu.memory_space<vmem>>, vector<1x128xf32>
    %c30 = arith.constant 30 : index
    %c0_30 = arith.constant 0 : index
    %30 = vector.load %arg2[%c30, %c0_30] : memref<32x128xf32, #tpu.memory_space<vmem>>, vector<1x128xf32>
    %c31 = arith.constant 31 : index
    %c0_31 = arith.constant 0 : index
    %31 = vector.load %arg2[%c31, %c0_31] : memref<32x128xf32, #tpu.memory_space<vmem>>, vector<1x128xf32>
    %c0_i32 = arith.constant 0 : i32
    %c8_i32 = arith.constant 8 : i32
    %32 = arith.muli %c0_i32, %c8_i32 : i32
    %33 = tpu.assume_multiple %32, 8 : i32
    %34 = arith.index_cast %33 : i32 to index
    %c0_32 = arith.constant 0 : index
    %35 = vector.load %arg1[%34, %c0_32] : memref<16x128xf32, #tpu.memory_space<vmem>>, vector<8x128xf32>
    %cst = arith.constant 0.000000e+00 : f32
    %36 = vector.broadcast %cst : f32 to vector<8x128xf32>
    %cst_33 = arith.constant 0.000000e+00 : f32
    %37 = vector.broadcast %cst_33 : f32 to vector<8x128xf32>
    %38 = vector.broadcast %0 : vector<1x128xf32> to vector<8x128xf32>
    %39 = arith.subf %35, %38 : vector<8x128xf32>
    %40 = arith.mulf %39, %39 : vector<8x128xf32>
    %41 = vector.broadcast %8 : vector<1x128xf32> to vector<8x128xf32>
    %42 = arith.mulf %40, %41 : vector<8x128xf32>
    %43 = math.exp2 %42 : vector<8x128xf32>
    %44 = arith.addf %37, %43 : vector<8x128xf32>
    %45 = vector.broadcast %16 : vector<1x128xf32> to vector<8x128xf32>
    %46 = arith.mulf %35, %45 : vector<8x128xf32>
    %47 = vector.broadcast %24 : vector<1x128xf32> to vector<8x128xf32>
    %48 = arith.addf %46, %47 : vector<8x128xf32>
    %49 = arith.mulf %43, %48 : vector<8x128xf32>
    %50 = arith.addf %36, %49 : vector<8x128xf32>
    %51 = vector.broadcast %1 : vector<1x128xf32> to vector<8x128xf32>
    %52 = arith.subf %35, %51 : vector<8x128xf32>
    %53 = arith.mulf %52, %52 : vector<8x128xf32>
    %54 = vector.broadcast %9 : vector<1x128xf32> to vector<8x128xf32>
    %55 = arith.mulf %53, %54 : vector<8x128xf32>
    %56 = math.exp2 %55 : vector<8x128xf32>
    %57 = arith.addf %44, %56 : vector<8x128xf32>
    %58 = vector.broadcast %17 : vector<1x128xf32> to vector<8x128xf32>
    %59 = arith.mulf %35, %58 : vector<8x128xf32>
    %60 = vector.broadcast %25 : vector<1x128xf32> to vector<8x128xf32>
    %61 = arith.addf %59, %60 : vector<8x128xf32>
    %62 = arith.mulf %56, %61 : vector<8x128xf32>
    %63 = arith.addf %50, %62 : vector<8x128xf32>
    %64 = vector.broadcast %2 : vector<1x128xf32> to vector<8x128xf32>
    %65 = arith.subf %35, %64 : vector<8x128xf32>
    %66 = arith.mulf %65, %65 : vector<8x128xf32>
    %67 = vector.broadcast %10 : vector<1x128xf32> to vector<8x128xf32>
    %68 = arith.mulf %66, %67 : vector<8x128xf32>
    %69 = math.exp2 %68 : vector<8x128xf32>
    %70 = arith.addf %57, %69 : vector<8x128xf32>
    %71 = vector.broadcast %18 : vector<1x128xf32> to vector<8x128xf32>
    %72 = arith.mulf %35, %71 : vector<8x128xf32>
    %73 = vector.broadcast %26 : vector<1x128xf32> to vector<8x128xf32>
    %74 = arith.addf %72, %73 : vector<8x128xf32>
    %75 = arith.mulf %69, %74 : vector<8x128xf32>
    %76 = arith.addf %63, %75 : vector<8x128xf32>
    %77 = vector.broadcast %3 : vector<1x128xf32> to vector<8x128xf32>
    %78 = arith.subf %35, %77 : vector<8x128xf32>
    %79 = arith.mulf %78, %78 : vector<8x128xf32>
    %80 = vector.broadcast %11 : vector<1x128xf32> to vector<8x128xf32>
    %81 = arith.mulf %79, %80 : vector<8x128xf32>
    %82 = math.exp2 %81 : vector<8x128xf32>
    %83 = arith.addf %70, %82 : vector<8x128xf32>
    %84 = vector.broadcast %19 : vector<1x128xf32> to vector<8x128xf32>
    %85 = arith.mulf %35, %84 : vector<8x128xf32>
    %86 = vector.broadcast %27 : vector<1x128xf32> to vector<8x128xf32>
    %87 = arith.addf %85, %86 : vector<8x128xf32>
    %88 = arith.mulf %82, %87 : vector<8x128xf32>
    %89 = arith.addf %76, %88 : vector<8x128xf32>
    %90 = vector.broadcast %4 : vector<1x128xf32> to vector<8x128xf32>
    %91 = arith.subf %35, %90 : vector<8x128xf32>
    %92 = arith.mulf %91, %91 : vector<8x128xf32>
    %93 = vector.broadcast %12 : vector<1x128xf32> to vector<8x128xf32>
    %94 = arith.mulf %92, %93 : vector<8x128xf32>
    %95 = math.exp2 %94 : vector<8x128xf32>
    %96 = arith.addf %83, %95 : vector<8x128xf32>
    %97 = vector.broadcast %20 : vector<1x128xf32> to vector<8x128xf32>
    %98 = arith.mulf %35, %97 : vector<8x128xf32>
    %99 = vector.broadcast %28 : vector<1x128xf32> to vector<8x128xf32>
    %100 = arith.addf %98, %99 : vector<8x128xf32>
    %101 = arith.mulf %95, %100 : vector<8x128xf32>
    %102 = arith.addf %89, %101 : vector<8x128xf32>
    %103 = vector.broadcast %5 : vector<1x128xf32> to vector<8x128xf32>
    %104 = arith.subf %35, %103 : vector<8x128xf32>
    %105 = arith.mulf %104, %104 : vector<8x128xf32>
    %106 = vector.broadcast %13 : vector<1x128xf32> to vector<8x128xf32>
    %107 = arith.mulf %105, %106 : vector<8x128xf32>
    %108 = math.exp2 %107 : vector<8x128xf32>
    %109 = arith.addf %96, %108 : vector<8x128xf32>
    %110 = vector.broadcast %21 : vector<1x128xf32> to vector<8x128xf32>
    %111 = arith.mulf %35, %110 : vector<8x128xf32>
    %112 = vector.broadcast %29 : vector<1x128xf32> to vector<8x128xf32>
    %113 = arith.addf %111, %112 : vector<8x128xf32>
    %114 = arith.mulf %108, %113 : vector<8x128xf32>
    %115 = arith.addf %102, %114 : vector<8x128xf32>
    %116 = vector.broadcast %6 : vector<1x128xf32> to vector<8x128xf32>
    %117 = arith.subf %35, %116 : vector<8x128xf32>
    %118 = arith.mulf %117, %117 : vector<8x128xf32>
    %119 = vector.broadcast %14 : vector<1x128xf32> to vector<8x128xf32>
    %120 = arith.mulf %118, %119 : vector<8x128xf32>
    %121 = math.exp2 %120 : vector<8x128xf32>
    %122 = arith.addf %109, %121 : vector<8x128xf32>
    %123 = vector.broadcast %22 : vector<1x128xf32> to vector<8x128xf32>
    %124 = arith.mulf %35, %123 : vector<8x128xf32>
    %125 = vector.broadcast %30 : vector<1x128xf32> to vector<8x128xf32>
    %126 = arith.addf %124, %125 : vector<8x128xf32>
    %127 = arith.mulf %121, %126 : vector<8x128xf32>
    %128 = arith.addf %115, %127 : vector<8x128xf32>
    %129 = vector.broadcast %7 : vector<1x128xf32> to vector<8x128xf32>
    %130 = arith.subf %35, %129 : vector<8x128xf32>
    %131 = arith.mulf %130, %130 : vector<8x128xf32>
    %132 = vector.broadcast %15 : vector<1x128xf32> to vector<8x128xf32>
    %133 = arith.mulf %131, %132 : vector<8x128xf32>
    %134 = math.exp2 %133 : vector<8x128xf32>
    %135 = arith.addf %122, %134 : vector<8x128xf32>
    %136 = vector.broadcast %23 : vector<1x128xf32> to vector<8x128xf32>
    %137 = arith.mulf %35, %136 : vector<8x128xf32>
    %138 = vector.broadcast %31 : vector<1x128xf32> to vector<8x128xf32>
    %139 = arith.addf %137, %138 : vector<8x128xf32>
    %140 = arith.mulf %134, %139 : vector<8x128xf32>
    %141 = arith.addf %128, %140 : vector<8x128xf32>
    %142 = arith.divf %141, %135 : vector<8x128xf32>
    %143 = arith.index_cast %33 : i32 to index
    %c0_34 = arith.constant 0 : index
    %144 = vector.load %arg3[%143, %c0_34] : memref<16x128xf32, #tpu.memory_space<vmem>>, vector<8x128xf32>
    tpu.vector_store %arg3[%143, %c0_34], %142 {strides = array<i32>} : memref<16x128xf32, #tpu.memory_space<vmem>>, vector<8x128xf32>,
    %c1_i32 = arith.constant 1 : i32
    %c8_i32_35 = arith.constant 8 : i32
    %145 = arith.muli %c1_i32, %c8_i32_35 : i32
    %146 = tpu.assume_multiple %145, 8 : i32
    %147 = arith.index_cast %146 : i32 to index
    %c0_36 = arith.constant 0 : index
    %148 = vector.load %arg1[%147, %c0_36] : memref<16x128xf32, #tpu.memory_space<vmem>>, vector<8x128xf32>
    %cst_37 = arith.constant 0.000000e+00 : f32
    %149 = vector.broadcast %cst_37 : f32 to vector<8x128xf32>
    %cst_38 = arith.constant 0.000000e+00 : f32
    %150 = vector.broadcast %cst_38 : f32 to vector<8x128xf32>
    %151 = vector.broadcast %0 : vector<1x128xf32> to vector<8x128xf32>
    %152 = arith.subf %148, %151 : vector<8x128xf32>
    %153 = arith.mulf %152, %152 : vector<8x128xf32>
    %154 = vector.broadcast %8 : vector<1x128xf32> to vector<8x128xf32>
    %155 = arith.mulf %153, %154 : vector<8x128xf32>
    %156 = math.exp2 %155 : vector<8x128xf32>
    %157 = arith.addf %150, %156 : vector<8x128xf32>
    %158 = vector.broadcast %16 : vector<1x128xf32> to vector<8x128xf32>
    %159 = arith.mulf %148, %158 : vector<8x128xf32>
    %160 = vector.broadcast %24 : vector<1x128xf32> to vector<8x128xf32>
    %161 = arith.addf %159, %160 : vector<8x128xf32>
    %162 = arith.mulf %156, %161 : vector<8x128xf32>
    %163 = arith.addf %149, %162 : vector<8x128xf32>
    %164 = vector.broadcast %1 : vector<1x128xf32> to vector<8x128xf32>
    %165 = arith.subf %148, %164 : vector<8x128xf32>
    %166 = arith.mulf %165, %165 : vector<8x128xf32>
    %167 = vector.broadcast %9 : vector<1x128xf32> to vector<8x128xf32>
    %168 = arith.mulf %166, %167 : vector<8x128xf32>
    %169 = math.exp2 %168 : vector<8x128xf32>
    %170 = arith.addf %157, %169 : vector<8x128xf32>
    %171 = vector.broadcast %17 : vector<1x128xf32> to vector<8x128xf32>
    %172 = arith.mulf %148, %171 : vector<8x128xf32>
    %173 = vector.broadcast %25 : vector<1x128xf32> to vector<8x128xf32>
    %174 = arith.addf %172, %173 : vector<8x128xf32>
    %175 = arith.mulf %169, %174 : vector<8x128xf32>
    %176 = arith.addf %163, %175 : vector<8x128xf32>
    %177 = vector.broadcast %2 : vector<1x128xf32> to vector<8x128xf32>
    %178 = arith.subf %148, %177 : vector<8x128xf32>
    %179 = arith.mulf %178, %178 : vector<8x128xf32>
    %180 = vector.broadcast %10 : vector<1x128xf32> to vector<8x128xf32>
    %181 = arith.mulf %179, %180 : vector<8x128xf32>
    %182 = math.exp2 %181 : vector<8x128xf32>
    %183 = arith.addf %170, %182 : vector<8x128xf32>
    %184 = vector.broadcast %18 : vector<1x128xf32> to vector<8x128xf32>
    %185 = arith.mulf %148, %184 : vector<8x128xf32>
    %186 = vector.broadcast %26 : vector<1x128xf32> to vector<8x128xf32>
    %187 = arith.addf %185, %186 : vector<8x128xf32>
    %188 = arith.mulf %182, %187 : vector<8x128xf32>
    %189 = arith.addf %176, %188 : vector<8x128xf32>
    %190 = vector.broadcast %3 : vector<1x128xf32> to vector<8x128xf32>
    %191 = arith.subf %148, %190 : vector<8x128xf32>
    %192 = arith.mulf %191, %191 : vector<8x128xf32>
    %193 = vector.broadcast %11 : vector<1x128xf32> to vector<8x128xf32>
    %194 = arith.mulf %192, %193 : vector<8x128xf32>
    %195 = math.exp2 %194 : vector<8x128xf32>
    %196 = arith.addf %183, %195 : vector<8x128xf32>
    %197 = vector.broadcast %19 : vector<1x128xf32> to vector<8x128xf32>
    %198 = arith.mulf %148, %197 : vector<8x128xf32>
    %199 = vector.broadcast %27 : vector<1x128xf32> to vector<8x128xf32>
    %200 = arith.addf %198, %199 : vector<8x128xf32>
    %201 = arith.mulf %195, %200 : vector<8x128xf32>
    %202 = arith.addf %189, %201 : vector<8x128xf32>
    %203 = vector.broadcast %4 : vector<1x128xf32> to vector<8x128xf32>
    %204 = arith.subf %148, %203 : vector<8x128xf32>
    %205 = arith.mulf %204, %204 : vector<8x128xf32>
    %206 = vector.broadcast %12 : vector<1x128xf32> to vector<8x128xf32>
    %207 = arith.mulf %205, %206 : vector<8x128xf32>
    %208 = math.exp2 %207 : vector<8x128xf32>
    %209 = arith.addf %196, %208 : vector<8x128xf32>
    %210 = vector.broadcast %20 : vector<1x128xf32> to vector<8x128xf32>
    %211 = arith.mulf %148, %210 : vector<8x128xf32>
    %212 = vector.broadcast %28 : vector<1x128xf32> to vector<8x128xf32>
    %213 = arith.addf %211, %212 : vector<8x128xf32>
    %214 = arith.mulf %208, %213 : vector<8x128xf32>
    %215 = arith.addf %202, %214 : vector<8x128xf32>
    %216 = vector.broadcast %5 : vector<1x128xf32> to vector<8x128xf32>
    %217 = arith.subf %148, %216 : vector<8x128xf32>
    %218 = arith.mulf %217, %217 : vector<8x128xf32>
    %219 = vector.broadcast %13 : vector<1x128xf32> to vector<8x128xf32>
    %220 = arith.mulf %218, %219 : vector<8x128xf32>
    %221 = math.exp2 %220 : vector<8x128xf32>
    %222 = arith.addf %209, %221 : vector<8x128xf32>
    %223 = vector.broadcast %21 : vector<1x128xf32> to vector<8x128xf32>
    %224 = arith.mulf %148, %223 : vector<8x128xf32>
    %225 = vector.broadcast %29 : vector<1x128xf32> to vector<8x128xf32>
    %226 = arith.addf %224, %225 : vector<8x128xf32>
    %227 = arith.mulf %221, %226 : vector<8x128xf32>
    %228 = arith.addf %215, %227 : vector<8x128xf32>
    %229 = vector.broadcast %6 : vector<1x128xf32> to vector<8x128xf32>
    %230 = arith.subf %148, %229 : vector<8x128xf32>
    %231 = arith.mulf %230, %230 : vector<8x128xf32>
    %232 = vector.broadcast %14 : vector<1x128xf32> to vector<8x128xf32>
    %233 = arith.mulf %231, %232 : vector<8x128xf32>
    %234 = math.exp2 %233 : vector<8x128xf32>
    %235 = arith.addf %222, %234 : vector<8x128xf32>
    %236 = vector.broadcast %22 : vector<1x128xf32> to vector<8x128xf32>
    %237 = arith.mulf %148, %236 : vector<8x128xf32>
    %238 = vector.broadcast %30 : vector<1x128xf32> to vector<8x128xf32>
    %239 = arith.addf %237, %238 : vector<8x128xf32>
    %240 = arith.mulf %234, %239 : vector<8x128xf32>
    %241 = arith.addf %228, %240 : vector<8x128xf32>
    %242 = vector.broadcast %7 : vector<1x128xf32> to vector<8x128xf32>
    %243 = arith.subf %148, %242 : vector<8x128xf32>
    %244 = arith.mulf %243, %243 : vector<8x128xf32>
    %245 = vector.broadcast %15 : vector<1x128xf32> to vector<8x128xf32>
    %246 = arith.mulf %244, %245 : vector<8x128xf32>
    %247 = math.exp2 %246 : vector<8x128xf32>
    %248 = arith.addf %235, %247 : vector<8x128xf32>
    %249 = vector.broadcast %23 : vector<1x128xf32> to vector<8x128xf32>
    %250 = arith.mulf %148, %249 : vector<8x128xf32>
    %251 = vector.broadcast %31 : vector<1x128xf32> to vector<8x128xf32>
    %252 = arith.addf %250, %251 : vector<8x128xf32>
    %253 = arith.mulf %247, %252 : vector<8x128xf32>
    %254 = arith.addf %241, %253 : vector<8x128xf32>
    %255 = arith.divf %254, %248 : vector<8x128xf32>
    %256 = arith.index_cast %146 : i32 to index
    %c0_39 = arith.constant 0 : index
    %257 = vector.load %arg3[%256, %c0_39] : memref<16x128xf32, #tpu.memory_space<vmem>>, vector<8x128xf32>
    tpu.vector_store %arg3[%256, %c0_39], %255 {strides = array<i32>} : memref<16x128xf32, #tpu.memory_space<vmem>>, vector<8x128xf32>,
    %c2_i32 = arith.constant 2 : i32
    return
  }
  func.func @transform_0(%arg0: i32) -> (i32, i32) {
    %c0_i32 = arith.constant 0 : i32
    %c0_i32_0 = arith.constant 0 : i32
    return %arg0, %c0_i32 : i32, i32
  }
  func.func @transform_1(%arg0: i32) -> (i32, i32) {
    %c0_i32 = arith.constant 0 : i32
    %c0_i32_0 = arith.constant 0 : i32
    %c0_i32_1 = arith.constant 0 : i32
    return %c0_i32, %c0_i32_0 : i32, i32
  }
  func.func @transform_2(%arg0: i32) -> (i32, i32) {
    %c0_i32 = arith.constant 0 : i32
    %c0_i32_0 = arith.constant 0 : i32
    return %arg0, %c0_i32 : i32, i32
  }
}

</mosaic_0001>

<llo_original>
// kernel: tpu_custom_call.1
$region0: #{tpu_custom_call.1}
  #allocation0 [shape = 'u32[]', space=smem, size = 0x4, offset = 0x4, fixed_abs, tag = 'smem constant byte address 0x4 - core index']
  #allocation1 [shape = 'u32[144,128]{1,0:T(1,128)}', space=vmem, size = 0x12000, scoped, tag = 'internal scratch']
  %s0 = inlined_call_operand.hbm [shape: f32[16,128], index: 0, kind: input, shape index: {}]
  %s1 = inlined_call_operand.hbm [shape: f32[32,128], index: 1, kind: input, shape index: {}]
  %s2 = inlined_call_operand.hbm [shape: f32[16,128], index: 2, kind: output, shape index: {}]
  %s3 = sld [smem:[#allocation0]]
  $region26: #{tpu_custom_call.1} parent=0
    _
  %s5 = ssub.s32 1, %s3
  %s6 = scalar_select 0, %s5, %s3
  $region1: #{tpu_custom_call.1} parent=0
    #allocation2 [shape = 'u8[8192]{0}', space=vmem, size = 0x2000, scoped, tag = 'input window, operand 0, single buffered']
    #allocation3 [shape = 's32[1]{0}', space=sflag, size = 0x4, scoped, tag = 'scoped memory for tpu_custom_call.1']
    #allocation4 [shape = 's32[1]{0}', space=sflag, size = 0x4, scoped, tag = 'scoped memory for tpu_custom_call.1']
    #allocation5 [shape = 'u8[16384]{0}', space=vmem, size = 0x4000, scoped, tag = 'input window, operand 1, single buffered']
    #allocation6 [shape = 's32[1]{0}', space=sflag, size = 0x4, scoped, tag = 'scoped memory for tpu_custom_call.1']
    #allocation7 [shape = 'u8[8192]{0}', space=vmem, size = 0x2000, scoped, tag = 'output window, operand 0, single buffered']
    %7 = vsyncpa [#allocation3], 0
    %8 = vsyncpa [#allocation6], 0
    %9 = vsyncpa [#allocation4], 0
    // Predicated region
    $region2: #{tpu_custom_call.1} parent=1 // pred_check
      _
    $region3: #{tpu_custom_call.1} parent=1 // pred_check_branch
      %11 = sbr.rel (0) target = $region5
    $region4: #{tpu_custom_call.1} parent=1 // pred_region
      %s13 = ssub.s32 256, 256
      %14 = vsyncadd [#allocation3], %s13
      %s15 = sshll.u32 [#allocation2], 4
      %s16 = int_to_ptr.vmem [resolvable:$true] %s15
      %21 = dma.hbm_to_vmem [thread:$0]  %s0, 256, %s16, [#allocation3], 128, 128, 8
    $region5: #{tpu_custom_call.1} parent=1 // pred_fallthru
      _
    // Predicated region
    $region6: #{tpu_custom_call.1} parent=1 // pred_check
      _
    $region7: #{tpu_custom_call.1} parent=1 // pred_check_branch
      %23 = sbr.rel (0) target = $region9
    $region8: #{tpu_custom_call.1} parent=1 // pred_region
      %s25 = ssub.s32 512, 512
      %26 = vsyncadd [#allocation6], %s25
      %s27 = sshll.u32 [#allocation5], 4
      %s28 = int_to_ptr.vmem [resolvable:$true] %s27
      %33 = dma.hbm_to_vmem [thread:$0]  %s1, 512, %s28, [#allocation6], 128, 128, 8
    $region9: #{tpu_custom_call.1} parent=1 // pred_fallthru
      _
    // Predicated region
    $region10: #{tpu_custom_call.1} parent=1 // pred_check
      _
    $region11: #{tpu_custom_call.1} parent=1 // pred_check_branch
      %35 = sbr.rel (0) target = $region13
    $region12: #{tpu_custom_call.1} parent=1 // pred_region
      %36 = dma.done [#allocation3], 256
    $region13: #{tpu_custom_call.1} parent=1 // pred_fallthru
      _
    // Predicated region
    $region14: #{tpu_custom_call.1} parent=1 // pred_check
      _
    $region15: #{tpu_custom_call.1} parent=1 // pred_check_branch
      %38 = sbr.rel (0) target = $region17
    $region16: #{tpu_custom_call.1} parent=1 // pred_region
      %39 = dma.done [#allocation6], 512
    $region17: #{tpu_custom_call.1} parent=1 // pred_fallthru
      _
    %v40 = vld [vmem:[#allocation5] sm:$0x1]
    %v41 = vld [vmem:[#allocation5 + $0x1] sm:$0x1]
    %v42 = vld [vmem:[#allocation5 + $0x2] sm:$0x1]
    %v43 = vld [vmem:[#allocation5 + $0x3] sm:$0x1]
    %v44 = vld [vmem:[#allocation5 + $0x4] sm:$0x1]
    %v45 = vld [vmem:[#allocation5 + $0x5] sm:$0x1]
    %v46 = vld [vmem:[#allocation5 + $0x6] sm:$0x1]
    %v47 = vld [vmem:[#allocation5 + $0x7] sm:$0x1]
    %v48 = vld [vmem:[#allocation5 + $0x8] sm:$0x1]
    %v49 = vld [vmem:[#allocation5 + $0x9] sm:$0x1]
    %v50 = vld [vmem:[#allocation5 + $0xa] sm:$0x1]
    %v51 = vld [vmem:[#allocation5 + $0xb] sm:$0x1]
    %v52 = vld [vmem:[#allocation5 + $0xc] sm:$0x1]
    %v53 = vld [vmem:[#allocation5 + $0xd] sm:$0x1]
    %v54 = vld [vmem:[#allocation5 + $0xe] sm:$0x1]
    %v55 = vld [vmem:[#allocation5 + $0xf] sm:$0x1]
    %v56 = vld [vmem:[#allocation5 + $0x10] sm:$0x1]
    %v57 = vld [vmem:[#allocation5 + $0x11] sm:$0x1]
    %v58 = vld [vmem:[#allocation5 + $0x12] sm:$0x1]
    %v59 = vld [vmem:[#allocation5 + $0x13] sm:$0x1]
    %v60 = vld [vmem:[#allocation5 + $0x14] sm:$0x1]
    %v61 = vld [vmem:[#allocation5 + $0x15] sm:$0x1]
    %v62 = vld [vmem:[#allocation5 + $0x16] sm:$0x1]
    %v63 = vld [vmem:[#allocation5 + $0x17] sm:$0x1]
    %v64 = vld [vmem:[#allocation5 + $0x18] sm:$0x1]
    %v65 = vld [vmem:[#allocation5 + $0x19] sm:$0x1]
    %v66 = vld [vmem:[#allocation5 + $0x1a] sm:$0x1]
    %v67 = vld [vmem:[#allocation5 + $0x1b] sm:$0x1]
    %v68 = vld [vmem:[#allocation5 + $0x1c] sm:$0x1]
    %v69 = vld [vmem:[#allocation5 + $0x1d] sm:$0x1]
    %v70 = vld [vmem:[#allocation5 + $0x1e] sm:$0x1]
    %v71 = vld [vmem:[#allocation5 + $0x1f] sm:$0x1]
    %v72 = vld [vmem:[#allocation2] sm:$0xff]
    %v73 = vlaneseq
    %v74 = vshrl.u32 %v73, 7
    %v75 = vsub.s32 0, %v74
    %v76 = vrot.slane %v40, %v75
    %v77 = vsub.f32 %v72, %v76
    %v78 = vmul.f32 %v77, %v77
    %v79 = vlaneseq
    %v80 = vshrl.u32 %v79, 7
    %v81 = vsub.s32 0, %v80
    %v82 = vrot.slane %v48, %v81
    %v83 = vmul.f32 %v78, %v82
    %v84 = vpow.pop %v83
    %v85 = vadd.f32 %v84, 0.0
    %v86 = vlaneseq
    %v87 = vshrl.u32 %v86, 7
    %v88 = vsub.s32 0, %v87
    %v89 = vrot.slane %v56, %v88
    %v90 = vmul.f32 %v72, %v89
    %v91 = vlaneseq
    %v92 = vshrl.u32 %v91, 7
    %v93 = vsub.s32 0, %v92
    %v94 = vrot.slane %v64, %v93
    %v95 = vadd.f32 %v90, %v94
    %v96 = vmul.f32 %v84, %v95
    %v97 = vadd.f32 %v96, 0.0
    %v98 = vlaneseq
    %v99 = vshrl.u32 %v98, 7
    %v100 = vsub.s32 0, %v99
    %v101 = vrot.slane %v41, %v100
    %v102 = vsub.f32 %v72, %v101
    %v103 = vmul.f32 %v102, %v102
    %v104 = vlaneseq
    %v105 = vshrl.u32 %v104, 7
    %v106 = vsub.s32 0, %v105
    %v107 = vrot.slane %v49, %v106
    %v108 = vmul.f32 %v103, %v107
    %v109 = vpow.pop %v108
    %v110 = vadd.f32 %v85, %v109
    %v111 = vlaneseq
    %v112 = vshrl.u32 %v111, 7
    %v113 = vsub.s32 0, %v112
    %v114 = vrot.slane %v57, %v113
    %v115 = vmul.f32 %v72, %v114
    %v116 = vlaneseq
    %v117 = vshrl.u32 %v116, 7
    %v118 = vsub.s32 0, %v117
    %v119 = vrot.slane %v65, %v118
    %v120 = vadd.f32 %v115, %v119
    %v121 = vmul.f32 %v109, %v120
    %v122 = vadd.f32 %v97, %v121
    %v123 = vlaneseq
    %v124 = vshrl.u32 %v123, 7
    %v125 = vsub.s32 0, %v124
    %v126 = vrot.slane %v42, %v125
    %v127 = vsub.f32 %v72, %v126
    %v128 = vmul.f32 %v127, %v127
    %v129 = vlaneseq
    %v130 = vshrl.u32 %v129, 7
    %v131 = vsub.s32 0, %v130
    %v132 = vrot.slane %v50, %v131
    %v133 = vmul.f32 %v128, %v132
    %v134 = vpow.pop %v133
    %v135 = vadd.f32 %v110, %v134
    %v136 = vlaneseq
    %v137 = vshrl.u32 %v136, 7
    %v138 = vsub.s32 0, %v137
    %v139 = vrot.slane %v58, %v138
    %v140 = vmul.f32 %v72, %v139
    %v141 = vlaneseq
    %v142 = vshrl.u32 %v141, 7
    %v143 = vsub.s32 0, %v142
    %v144 = vrot.slane %v66, %v143
    %v145 = vadd.f32 %v140, %v144
    %v146 = vmul.f32 %v134, %v145
    %v147 = vadd.f32 %v122, %v146
    %v148 = vlaneseq
    %v149 = vshrl.u32 %v148, 7
    %v150 = vsub.s32 0, %v149
    %v151 = vrot.slane %v43, %v150
    %v152 = vsub.f32 %v72, %v151
    %v153 = vmul.f32 %v152, %v152
    %v154 = vlaneseq
    %v155 = vshrl.u32 %v154, 7
    %v156 = vsub.s32 0, %v155
    %v157 = vrot.slane %v51, %v156
    %v158 = vmul.f32 %v153, %v157
    %v159 = vpow.pop %v158
    %v160 = vadd.f32 %v135, %v159
    %v161 = vlaneseq
    %v162 = vshrl.u32 %v161, 7
    %v163 = vsub.s32 0, %v162
    %v164 = vrot.slane %v59, %v163
    %v165 = vmul.f32 %v72, %v164
    %v166 = vlaneseq
    %v167 = vshrl.u32 %v166, 7
    %v168 = vsub.s32 0, %v167
    %v169 = vrot.slane %v67, %v168
    %v170 = vadd.f32 %v165, %v169
    %v171 = vmul.f32 %v159, %v170
    %v172 = vadd.f32 %v147, %v171
    %v173 = vlaneseq
    %v174 = vshrl.u32 %v173, 7
    %v175 = vsub.s32 0, %v174
    %v176 = vrot.slane %v44, %v175
    %v177 = vsub.f32 %v72, %v176
    %v178 = vmul.f32 %v177, %v177
    %v179 = vlaneseq
    %v180 = vshrl.u32 %v179, 7
    %v181 = vsub.s32 0, %v180
    %v182 = vrot.slane %v52, %v181
    %v183 = vmul.f32 %v178, %v182
    %v184 = vpow.pop %v183
    %v185 = vadd.f32 %v160, %v184
    %v186 = vlaneseq
    %v187 = vshrl.u32 %v186, 7
    %v188 = vsub.s32 0, %v187
    %v189 = vrot.slane %v60, %v188
    %v190 = vmul.f32 %v72, %v189
    %v191 = vlaneseq
    %v192 = vshrl.u32 %v191, 7
    %v193 = vsub.s32 0, %v192
    %v194 = vrot.slane %v68, %v193
    %v195 = vadd.f32 %v190, %v194
    %v196 = vmul.f32 %v184, %v195
    %v197 = vadd.f32 %v172, %v196
    %v198 = vlaneseq
    %v199 = vshrl.u32 %v198, 7
    %v200 = vsub.s32 0, %v199
    %v201 = vrot.slane %v45, %v200
    %v202 = vsub.f32 %v72, %v201
    %v203 = vmul.f32 %v202, %v202
    %v204 = vlaneseq
    %v205 = vshrl.u32 %v204, 7
    %v206 = vsub.s32 0, %v205
    %v207 = vrot.slane %v53, %v206
    %v208 = vmul.f32 %v203, %v207
    %v209 = vpow.pop %v208
    %v210 = vadd.f32 %v185, %v209
    %v211 = vlaneseq
    %v212 = vshrl.u32 %v211, 7
    %v213 = vsub.s32 0, %v212
    %v214 = vrot.slane %v61, %v213
    %v215 = vmul.f32 %v72, %v214
    %v216 = vlaneseq
    %v217 = vshrl.u32 %v216, 7
    %v218 = vsub.s32 0, %v217
    %v219 = vrot.slane %v69, %v218
    %v220 = vadd.f32 %v215, %v219
    %v221 = vmul.f32 %v209, %v220
    %v222 = vadd.f32 %v197, %v221
    %v223 = vlaneseq
    %v224 = vshrl.u32 %v223, 7
    %v225 = vsub.s32 0, %v224
    %v226 = vrot.slane %v46, %v225
    %v227 = vsub.f32 %v72, %v226
    %v228 = vmul.f32 %v227, %v227
    %v229 = vlaneseq
    %v230 = vshrl.u32 %v229, 7
    %v231 = vsub.s32 0, %v230
    %v232 = vrot.slane %v54, %v231
    %v233 = vmul.f32 %v228, %v232
    %v234 = vpow.pop %v233
    %v235 = vadd.f32 %v210, %v234
    %v236 = vlaneseq
    %v237 = vshrl.u32 %v236, 7
    %v238 = vsub.s32 0, %v237
    %v239 = vrot.slane %v62, %v238
    %v240 = vmul.f32 %v72, %v239
    %v241 = vlaneseq
    %v242 = vshrl.u32 %v241, 7
    %v243 = vsub.s32 0, %v242
    %v244 = vrot.slane %v70, %v243
    %v245 = vadd.f32 %v240, %v244
    %v246 = vmul.f32 %v234, %v245
    %v247 = vadd.f32 %v222, %v246
    %v248 = vlaneseq
    %v249 = vshrl.u32 %v248, 7
    %v250 = vsub.s32 0, %v249
    %v251 = vrot.slane %v47, %v250
    %v252 = vsub.f32 %v72, %v251
    %v253 = vmul.f32 %v252, %v252
    %v254 = vlaneseq
    %v255 = vshrl.u32 %v254, 7
    %v256 = vsub.s32 0, %v255
    %v257 = vrot.slane %v55, %v256
    %v258 = vmul.f32 %v253, %v257
    %v259 = vpow.pop %v258
    %v260 = vadd.f32 %v235, %v259
    %v261 = vlaneseq
    %v262 = vshrl.u32 %v261, 7
    %v263 = vsub.s32 0, %v262
    %v264 = vrot.slane %v63, %v263
    %v265 = vmul.f32 %v72, %v264
    %v266 = vlaneseq
    %v267 = vshrl.u32 %v266, 7
    %v268 = vsub.s32 0, %v267
    %v269 = vrot.slane %v71, %v268
    %v270 = vadd.f32 %v265, %v269
    %v271 = vmul.f32 %v259, %v270
    %v272 = vadd.f32 %v247, %v271
    %v273 = vrcp.pop %v260
    %v274 = vmul.f32 %v272, %v273
    %275 = vst [vmem:[#allocation7] sm:$0xff] %v274
    %s276 = scalar_lea.vmem [#allocation2], 8
    %v277 = vld [vmem:[%s276] sm:$0xff]
    %v278 = vsub.f32 %v277, %v76
    %v279 = vmul.f32 %v278, %v278
    %v280 = vmul.f32 %v279, %v82
    %v281 = vpow.pop %v280
    %v282 = vadd.f32 %v281, 0.0
    %v283 = vmul.f32 %v277, %v89
    %v284 = vadd.f32 %v283, %v94
    %v285 = vmul.f32 %v281, %v284
    %v286 = vadd.f32 %v285, 0.0
    %v287 = vsub.f32 %v277, %v101
    %v288 = vmul.f32 %v287, %v287
    %v289 = vmul.f32 %v288, %v107
    %v290 = vpow.pop %v289
    %v291 = vadd.f32 %v282, %v290
    %v292 = vmul.f32 %v277, %v114
    %v293 = vadd.f32 %v292, %v119
    %v294 = vmul.f32 %v290, %v293
    %v295 = vadd.f32 %v286, %v294
    %v296 = vsub.f32 %v277, %v126
    %v297 = vmul.f32 %v296, %v296
    %v298 = vmul.f32 %v297, %v132
    %v299 = vpow.pop %v298
    %v300 = vadd.f32 %v291, %v299
    %v301 = vmul.f32 %v277, %v139
    %v302 = vadd.f32 %v301, %v144
    %v303 = vmul.f32 %v299, %v302
    %v304 = vadd.f32 %v295, %v303
    %v305 = vsub.f32 %v277, %v151
    %v306 = vmul.f32 %v305, %v305
    %v307 = vmul.f32 %v306, %v157
    %v308 = vpow.pop %v307
    %v309 = vadd.f32 %v300, %v308
    %v310 = vmul.f32 %v277, %v164
    %v311 = vadd.f32 %v310, %v169
    %v312 = vmul.f32 %v308, %v311
    %v313 = vadd.f32 %v304, %v312
    %v314 = vsub.f32 %v277, %v176
    %v315 = vmul.f32 %v314, %v314
    %v316 = vmul.f32 %v315, %v182
    %v317 = vpow.pop %v316
    %v318 = vadd.f32 %v309, %v317
    %v319 = vmul.f32 %v277, %v189
    %v320 = vadd.f32 %v319, %v194
    %v321 = vmul.f32 %v317, %v320
    %v322 = vadd.f32 %v313, %v321
    %v323 = vsub.f32 %v277, %v201
    %v324 = vmul.f32 %v323, %v323
    %v325 = vmul.f32 %v324, %v207
    %v326 = vpow.pop %v325
    %v327 = vadd.f32 %v318, %v326
    %v328 = vmul.f32 %v277, %v214
    %v329 = vadd.f32 %v328, %v219
    %v330 = vmul.f32 %v326, %v329
    %v331 = vadd.f32 %v322, %v330
    %v332 = vsub.f32 %v277, %v226
    %v333 = vmul.f32 %v332, %v332
    %v334 = vmul.f32 %v333, %v232
    %v335 = vpow.pop %v334
    %v336 = vadd.f32 %v327, %v335
    %v337 = vmul.f32 %v277, %v239
    %v338 = vadd.f32 %v337, %v244
    %v339 = vmul.f32 %v335, %v338
    %v340 = vadd.f32 %v331, %v339
    %v341 = vsub.f32 %v277, %v251
    %v342 = vmul.f32 %v341, %v341
    %v343 = vmul.f32 %v342, %v257
    %v344 = vpow.pop %v343
    %v345 = vadd.f32 %v336, %v344
    %v346 = vmul.f32 %v277, %v264
    %v347 = vadd.f32 %v346, %v269
    %v348 = vmul.f32 %v344, %v347
    %v349 = vadd.f32 %v340, %v348
    %v350 = vrcp.pop %v345
    %v351 = vmul.f32 %v349, %v350
    %s352 = scalar_lea.vmem [#allocation7], 8
    %353 = vst [vmem:[%s352] sm:$0xff] %v351
    // Predicated region
    $region18: #{tpu_custom_call.1} parent=1 // pred_check
      _
    $region19: #{tpu_custom_call.1} parent=1 // pred_check_branch
      %355 = sbr.rel (0) target = $region21
    $region20: #{tpu_custom_call.1} parent=1 // pred_region
      %s357 = ssub.s32 256, 256
      %358 = vsyncadd [#allocation4], %s357
      %s359 = sshll.u32 [#allocation7], 4
      %s360 = int_to_ptr.vmem [resolvable:$true] %s359
      %365 = dma.vmem_to_hbm [thread:$0]  %s360, 256, %s2, [#allocation4], 128, 128, 8
    $region21: #{tpu_custom_call.1} parent=1 // pred_fallthru
      _
    // Predicated region
    $region22: #{tpu_custom_call.1} parent=1 // pred_check
      _
    $region23: #{tpu_custom_call.1} parent=1 // pred_check_branch
      %367 = sbr.rel (0) target = $region25
    $region24: #{tpu_custom_call.1} parent=1 // pred_region
      %368 = dma.done [#allocation4], 256
    $region25: #{tpu_custom_call.1} parent=1 // pred_fallthru
      _
    %369 = vsyncpa [#allocation3], 1
    %370 = vsyncpa [#allocation6], 1
    %371 = vsyncpa [#allocation4], 1

</llo_original>
